<compile_context>
chip_gen: v5e
topology: v5e:2x2
jax: 0.10.0
libtpu: 0.0.40
codegen_flags: <defaults>
</compile_context>

<pallas_src>
import jax
import jax.numpy as jnp
from jax.experimental import pallas as pl
from jax.experimental.pallas import tpu as pltpu


# ----------------------------------------------------------------------------
# Primary path: the identity is free. Do not launch a kernel for it.
# ----------------------------------------------------------------------------
def identity_transform(x: jax.Array) -> jax.Array:
    """IdentityTransform.forward: y = x (trace-time identity, zero cost)."""
    return x


# invert_forward has identical semantics to forward.
identity_invert_forward = identity_transform


# ----------------------------------------------------------------------------
# Secondary path: caller explicitly needs a distinct output buffer.
# Single (or chunked) HBM->HBM DMA; never touches VMEM/vregs/MXU.
# ----------------------------------------------------------------------------
def _num_chunks(x: jax.Array) -> int:
    """Split large copies into up to 4 leading-axis chunks; small stay 1-DMA."""
    nbytes = x.size * jnp.dtype(x.dtype).itemsize
    if x.ndim == 0 or nbytes < (8 << 20):
        return 1
    lead = x.shape[0]
    for k in (4, 3, 2):
        if lead % k == 0:
            return k
    return 1


def _make_dma_copy_kernel(n_chunks: int, chunk_rows: int):
    def kernel(x_hbm, o_hbm, sem):
        if n_chunks == 1:
            cp = pltpu.make_async_copy(x_hbm, o_hbm, sem.at[0])
            cp.start()
            cp.wait()
        else:
            copies = []
            for c in range(n_chunks):
                sl = pl.ds(c * chunk_rows, chunk_rows)
                copies.append(
                    pltpu.make_async_copy(x_hbm.at[sl], o_hbm.at[sl], sem.at[c])
                )
            # Issue everything, then wait: all DMAs in flight concurrently.
            for cp in copies:
                cp.start()
            for cp in copies:
                cp.wait()

    return kernel


def identity_transform_copy(x: jax.Array) -> jax.Array:
    """Identity that materializes a distinct output buffer via HBM->HBM DMA."""
    n_chunks = _num_chunks(x)
    chunk_rows = x.shape[0] // n_chunks if (x.ndim > 0 and n_chunks > 1) else 0
    nbytes = x.size * jnp.dtype(x.dtype).itemsize

    return pl.pallas_call(
        _make_dma_copy_kernel(n_chunks, chunk_rows),
        out_shape=jax.ShapeDtypeStruct(x.shape, x.dtype),
        in_specs=[pl.BlockSpec(memory_space=pl.ANY)],
        out_specs=pl.BlockSpec(memory_space=pl.ANY),
        scratch_shapes=[pltpu.SemaphoreType.DMA((n_chunks,))],
        cost_estimate=pl.CostEstimate(
            flops=0, transcendentals=0, bytes_accessed=2 * nbytes
        ),
    )(x)


if __name__ == "__main__":
    key = jax.random.PRNGKey(0)
    x = jax.random.normal(key, (2, 4, 16, 16), dtype=jnp.float32)

    # Primary (free) identity path.
    y = identity_transform(x)
    jax.block_until_ready(y)
    assert y.shape == x.shape and y.dtype == x.dtype
    assert bool(jnp.array_equal(y, x))

    # invert_forward is the same identity.
    y_inv = identity_invert_forward(x)
    jax.block_until_ready(y_inv)
    assert bool(jnp.array_equal(y_inv, x))

    # Explicit-copy Pallas path (distinct buffer, HBM-bandwidth bound DMA).
    y2 = identity_transform_copy(x)
    jax.block_until_ready(y2)
    assert y2.shape == x.shape and y2.dtype == x.dtype
    assert bool(jnp.array_equal(y2, x))

    print("KERNEL_OK")
</pallas_src>

<mosaic_0001>
module attributes {stable_mosaic.version = 11 : i64} {
  func.func @kernel(%arg0: memref<2x4x16x16xf32, #tpu.memory_space<any>>, %arg1: memref<2x4x16x16xf32, #tpu.memory_space<any>>, %arg2: memref<1x!tpu.dma_semaphore, #tpu.memory_space<semaphore_mem>>) attributes {dimension_semantics = [], scalar_prefetch = 0 : i64, scratch_operands = 1 : i64, tpu.core_type = #tpu.core_type<tc>} {
    %c0_i32 = arith.constant 0 : i32
    %0 = tpu.memref_slice %arg2[%c0_i32] : memref<1x!tpu.dma_semaphore, #tpu.memory_space<semaphore_mem>> -> memref<1x!tpu.dma_semaphore, #tpu.memory_space<semaphore_mem>>
    %1 = tpu.memref_squeeze %0 : memref<1x!tpu.dma_semaphore, #tpu.memory_space<semaphore_mem>> -> memref<!tpu.dma_semaphore, #tpu.memory_space<semaphore_mem>>
    tpu.enqueue_dma source(%arg0 : memref<2x4x16x16xf32, #tpu.memory_space<any>>) target(%arg1 : memref<2x4x16x16xf32, #tpu.memory_space<any>>) target_semaphore(%1 : memref<!tpu.dma_semaphore, #tpu.memory_space<semaphore_mem>>)
    %c0_i32_0 = arith.constant 0 : i32
    %2 = tpu.memref_slice %arg2[%c0_i32_0] : memref<1x!tpu.dma_semaphore, #tpu.memory_space<semaphore_mem>> -> memref<1x!tpu.dma_semaphore, #tpu.memory_space<semaphore_mem>>
    %3 = tpu.memref_squeeze %2 : memref<1x!tpu.dma_semaphore, #tpu.memory_space<semaphore_mem>> -> memref<!tpu.dma_semaphore, #tpu.memory_space<semaphore_mem>>
    tpu.wait_dma2 semaphore(%3 : memref<!tpu.dma_semaphore, #tpu.memory_space<semaphore_mem>>) src(%arg0 : memref<2x4x16x16xf32, #tpu.memory_space<any>>) dst(%arg1 : memref<2x4x16x16xf32, #tpu.memory_space<any>>)
    return
  }
}

</mosaic_0001>

<llo_original>
// kernel: tpu_custom_call.1
$region0: #{tpu_custom_call.1}
  #allocation0 [shape = 'u32[]', space=smem, size = 0x4, offset = 0x4, fixed_abs, tag = 'smem constant byte address 0x4 - core index']
  #allocation1 [shape = 'u32[72,128]{1,0:T(1,128)}', space=vmem, size = 0x9000, scoped, tag = 'internal scratch']
  #allocation2 [shape = 's32[1]{0}', space=sflag, size = 0x4, scoped, tag = 'scratch operand']
  #allocation3 [shape = 's32[]', space=sflag, size = 0x4, offset = 0, fixed_abs, tag = 'sflag constant byte address 0x0 - dummy sync flag']
  #allocation4 [shape = 'u32[0]{0}', space=smem, size = 0, offset = 0, fixed_abs, tag = 'smem constant byte address 0x0 - null']
  %s0 = inlined_call_operand.hbm [shape: f32[2,4,16,16], index: 0, kind: input, shape index: {}]
  %s1 = inlined_call_operand.hbm [shape: f32[2,4,16,16], index: 1, kind: output, shape index: {}]
  %s2 = sld [smem:[#allocation0]]
  $region2: #{tpu_custom_call.1} parent=0
    _
  %s4 = ssub.s32 1, %s2
  %s5 = scalar_select 0, %s4, %s2
  %s7 = sshll.u32 1, 14
  %s8 = sxor.u32 4294967295, %s7
  %s10 = sshll.u32 %s0, 4
  %s11 = int_to_ptr.hbm [resolvable:$true] %s10
  %s12 = sshll.u32 %s1, 4
  %s13 = int_to_ptr.hbm [resolvable:$true] %s12
  %16 = dma.general %s11, 2048, %s13, [#allocation2], [#allocation3], [#allocation4], 0, 0
  %s17 = smul.u32 2, 4
  %s18 = smul.u32 %s17, 16
  %s19 = smul.u32 %s18, 1
  %s20 = sshll.u32 %s19, 4
  %21 = dma.done [#allocation2], %s20
  %22 = vsyncmov [#allocation2]
  %s23 = vpop.sfrf %22
  %p24 = scmp.eq.s32.totalorder %s23, 0
  %p25 = pneg %p24
  %27 = shalt.err (%p25)

</llo_original>
